<compile_context>
chip_gen: v5e
topology: v5e:2x2
jax: 0.10.0
libtpu: 0.0.40
codegen_flags: <defaults>
</compile_context>

<pallas_src>
import functools

import jax
import jax.numpy as jnp
from jax.experimental import pallas as pl
from jax.experimental.pallas import tpu as pltpu


# --------------------------------------------------------------------------
# Kernel
# --------------------------------------------------------------------------
def _discriminator_kernel(n_hidden_layers, bidirectional, out_dim, *refs):
    """refs = (s1, s2, W1, b1, ..., Wk, bk, Wout, bout, out).

    Weights arrive bf16 (fed straight to the MXU with f32 accumulation),
    biases f32.  When bidirectional, forward/backward MLPs were fused
    wrapper-side, so one matmul stack serves both directions; the two halves
    of the final [TB, 2*out] result are averaged here.
    """
    s1_ref, s2_ref = refs[0], refs[1]
    out_ref = refs[-1]
    params = refs[2:-1]

    s1 = s1_ref[...]                       # f32 [TB, D]
    s2 = s2_ref[...]
    diff = s1 - s2
    # Feature slab [TB, 5D]: one K=5D matmul replaces five serial K=D dots.
    feats = jnp.concatenate([s1, s2, diff, s1 * s2, jnp.abs(diff)], axis=-1)

    h = feats
    for li in range(n_hidden_layers):
        w = params[2 * li][...]            # bf16 [*, N]
        b = params[2 * li + 1][...]        # f32 [1, N] broadcasts over batch
        h = jnp.maximum(
            jnp.dot(h.astype(jnp.bfloat16), w,
                    preferred_element_type=jnp.float32) + b,
            0.0)
        # TODO(synk): nn.Dropout is identity here (eval mode only).

    w_out = params[-2][...]
    b_out = params[-1][...]
    scores = jnp.dot(h.astype(jnp.bfloat16), w_out,
                     preferred_element_type=jnp.float32) + b_out

    if bidirectional:
        # Fused output is [TB, 2*out]: forward half | backward half.
        scores = (scores[:, :out_dim] + scores[:, out_dim:2 * out_dim]) * 0.5

    out_ref[...] = scores.astype(out_ref.dtype)


# --------------------------------------------------------------------------
# Wrapper-side parameter fusion + pallas_call
# --------------------------------------------------------------------------
def _block_diag(a, b):
    top = jnp.concatenate([a, jnp.zeros((a.shape[0], b.shape[1]), a.dtype)], 1)
    bot = jnp.concatenate([jnp.zeros((b.shape[0], a.shape[1]), b.dtype), b], 1)
    return jnp.concatenate([top, bot], axis=0)


def _fuse_bidirectional_params(fwd, bwd, embed_dim):
    """Pack forward+backward MLP params so one matmul stack serves both."""
    D = embed_dim
    n_total = len(fwd) // 2                     # hidden layers + output layer
    # Backward layer-1 reads [s2, s1, s2-s1, s1*s2, |s1-s2|]; permute its rows
    # (swap chunks 0/1, negate chunk 2) so it consumes the *forward* slab.
    w0b = bwd[0]
    w0b = jnp.concatenate(
        [w0b[D:2 * D], w0b[:D], -w0b[2 * D:3 * D], w0b[3 * D:]], axis=0)
    packed = [jnp.concatenate([fwd[0], w0b], axis=1),
              jnp.concatenate([fwd[1], bwd[1]], axis=1)]
    for li in range(1, n_total):
        packed.append(_block_diag(fwd[2 * li], bwd[2 * li]))
        packed.append(jnp.concatenate([fwd[2 * li + 1], bwd[2 * li + 1]], 1))
    return packed


def mlp_discriminator(s1, s2, fwd_params, bwd_params=None, *, block_b=128):
    """s1, s2: [B, embed_dim] f32.  params: flat [W1,b1,...,Wk,bk,Wout,bout]."""
    B, embed_dim = s1.shape
    n_hidden_layers = len(fwd_params) // 2 - 1
    out_dim = fwd_params[-1].shape[-1]
    bidirectional = bwd_params is not None

    params = (_fuse_bidirectional_params(fwd_params, bwd_params, embed_dim)
              if bidirectional else list(fwd_params))
    # bf16 weights into the MXU (f32 accumulation in-kernel); biases stay f32.
    params = [p.astype(jnp.bfloat16) if i % 2 == 0 else p.astype(jnp.float32)
              for i, p in enumerate(params)]

    # Batch tiling: weights are DMA'd once and stay VMEM-resident across steps.
    tb = min(block_b, B)
    b_padded = pl.cdiv(B, tb) * tb
    if b_padded != B:
        pad = b_padded - B
        s1 = jnp.concatenate([s1, jnp.zeros((pad, embed_dim), s1.dtype)], 0)
        s2 = jnp.concatenate([s2, jnp.zeros((pad, embed_dim), s2.dtype)], 0)
    grid = (b_padded // tb,)

    act_spec = pl.BlockSpec((tb, embed_dim), lambda i: (i, 0))
    weight_specs = [pl.BlockSpec(p.shape, lambda i: (0, 0)) for p in params]
    out_spec = pl.BlockSpec((tb, out_dim), lambda i: (i, 0))

    kernel = functools.partial(
        _discriminator_kernel, n_hidden_layers, bidirectional, out_dim)

    out = pl.pallas_call(
        kernel,
        out_shape=jax.ShapeDtypeStruct((b_padded, out_dim), jnp.float32),
        grid=grid,
        in_specs=[act_spec, act_spec] + weight_specs,
        out_specs=out_spec,
        compiler_params=pltpu.CompilerParams(
            dimension_semantics=("parallel",)),
    )(s1, s2, *params)
    return out[:B]


# --------------------------------------------------------------------------
# Deterministic parameter construction (PyTorch nn.Linear default init)
# --------------------------------------------------------------------------
def init_linear(key, fan_in, fan_out):
    kw, kb = jax.random.split(key)
    bound = 1.0 / float(fan_in) ** 0.5
    w = jax.random.uniform(kw, (fan_in, fan_out), jnp.float32, -bound, bound)
    b = jax.random.uniform(kb, (1, fan_out), jnp.float32, -bound, bound)
    return w, b


def init_mlp_params(key, input_dims, n_hiddens, n_class):
    params = []
    cur = input_dims
    keys = jax.random.split(key, len(n_hiddens) + 1)
    for i, h in enumerate(n_hiddens):
        w, b = init_linear(keys[i], cur, h)
        params += [w, b]
        cur = h
    w, b = init_linear(keys[-1], cur, n_class)
    params += [w, b]
    return params


# --------------------------------------------------------------------------
# Pure-JAX references for validation
# --------------------------------------------------------------------------
def _ref_mlp(x, params, cast_bf16):
    n = len(params) // 2 - 1
    for i in range(n):
        w, b = params[2 * i], params[2 * i + 1]
        if cast_bf16:
            x = jnp.dot(x.astype(jnp.bfloat16), w.astype(jnp.bfloat16),
                        preferred_element_type=jnp.float32) + b
        else:
            x = x @ w + b
        x = jnp.maximum(x, 0.0)
    w, b = params[-2], params[-1]
    if cast_bf16:
        return jnp.dot(x.astype(jnp.bfloat16), w.astype(jnp.bfloat16),
                       preferred_element_type=jnp.float32) + b
    return x @ w + b


def _ref_forward(s1, s2, fwd_params, bwd_params, cast_bf16=False):
    feats = jnp.concatenate([s1, s2, s1 - s2, s1 * s2, jnp.abs(s1 - s2)], -1)
    scores = _ref_mlp(feats, fwd_params, cast_bf16)
    if bwd_params is not None:
        bfeats = jnp.concatenate(
            [s2, s1, s2 - s1, s1 * s2, jnp.abs(s1 - s2)], -1)
        scores = (scores + _ref_mlp(bfeats, bwd_params, cast_bf16)) * 0.5
    return scores


if __name__ == "__main__":
    # Hyperparameters consistent with the module's __init__.
    batch = 60                      # not a multiple of the batch tile -> pads
    embed_dim = 32
    hparams = {
        "hidden_state": 64,
        "hidden_layers": 2,
        "hidden_dropout": 0.1,      # identity at eval
        "input_dropout": 0.1,       # identity at eval
        "bidirectional": True,
    }
    output_dim = 8

    key = jax.random.PRNGKey(0)
    k_s1, k_s2, k_fwd, k_bwd = jax.random.split(key, 4)
    s1 = jax.random.normal(k_s1, (batch, embed_dim), jnp.float32)
    s2 = jax.random.normal(k_s2, (batch, embed_dim), jnp.float32)

    hiddens = [hparams["hidden_state"]] * hparams["hidden_layers"]
    fwd_params = init_mlp_params(k_fwd, embed_dim * 5, hiddens, output_dim)
    bwd_params = (init_mlp_params(k_bwd, embed_dim * 5, hiddens, output_dim)
                  if hparams["bidirectional"] else None)

    # block_b=16 -> 4 grid steps: exercises resident weights + batch padding.
    out = mlp_discriminator(s1, s2, fwd_params, bwd_params, block_b=16)
    out = jax.block_until_ready(out)
    assert out.shape == (batch, output_dim)

    # Tight check vs a reference mirroring kernel numerics (bf16 operands,
    # f32 accumulation); loose check vs the pure-f32 module forward.
    ref_bf16 = _ref_forward(s1, s2, fwd_params, bwd_params, cast_bf16=True)
    ref_f32 = _ref_forward(s1, s2, fwd_params, bwd_params, cast_bf16=False)
    assert jnp.allclose(out, ref_bf16, atol=5e-3, rtol=5e-3), "mismatch (bf16 ref)"
    assert jnp.allclose(out, ref_f32, atol=5e-2, rtol=5e-2), "mismatch (f32 ref)"

    print("KERNEL_OK")
</pallas_src>

<mosaic_0001>
module attributes {stable_mosaic.version = 11 : i64} {
  func.func @_discriminator_kernel(%arg0: i32, %arg1: memref<16x32xf32, #tpu.memory_space<vmem>>, %arg2: memref<16x32xf32, #tpu.memory_space<vmem>>, %arg3: memref<160x128xbf16, #tpu.memory_space<vmem>>, %arg4: memref<1x128xf32, #tpu.memory_space<vmem>>, %arg5: memref<128x128xbf16, #tpu.memory_space<vmem>>, %arg6: memref<1x128xf32, #tpu.memory_space<vmem>>, %arg7: memref<128x16xbf16, #tpu.memory_space<vmem>>, %arg8: memref<1x16xf32, #tpu.memory_space<vmem>>, %arg9: memref<16x8xf32, #tpu.memory_space<vmem>>) attributes {dimension_semantics = [#tpu.dimension_semantics<parallel>], iteration_bounds = array<i64: 4>, scalar_prefetch = 0 : i64, scratch_operands = 0 : i64, tpu.core_type = #tpu.core_type<tc>, window_params = [{transform_indices = @transform_0, window_bounds = array<i64: 16, 32>}, {transform_indices = @transform_1, window_bounds = array<i64: 16, 32>}, {pipeline_mode = #tpu.pipeline_mode<synchronous>, transform_indices = @transform_2, window_bounds = array<i64: 160, 128>}, {pipeline_mode = #tpu.pipeline_mode<synchronous>, transform_indices = @transform_3, window_bounds = array<i64: 1, 128>}, {pipeline_mode = #tpu.pipeline_mode<synchronous>, transform_indices = @transform_4, window_bounds = array<i64: 128, 128>}, {pipeline_mode = #tpu.pipeline_mode<synchronous>, transform_indices = @transform_5, window_bounds = array<i64: 1, 128>}, {pipeline_mode = #tpu.pipeline_mode<synchronous>, transform_indices = @transform_6, window_bounds = array<i64: 128, 16>}, {pipeline_mode = #tpu.pipeline_mode<synchronous>, transform_indices = @transform_7, window_bounds = array<i64: 1, 16>}, {transform_indices = @transform_8, window_bounds = array<i64: 16, 8>}]} {
    %c0 = arith.constant 0 : index
    %c0_0 = arith.constant 0 : index
    %0 = vector.load %arg1[%c0, %c0_0] : memref<16x32xf32, #tpu.memory_space<vmem>>, vector<16x32xf32>
    %c0_1 = arith.constant 0 : index
    %c0_2 = arith.constant 0 : index
    %1 = vector.load %arg2[%c0_1, %c0_2] : memref<16x32xf32, #tpu.memory_space<vmem>>, vector<16x32xf32>
    %2 = arith.subf %0, %1 : vector<16x32xf32>
    %3 = arith.mulf %0, %1 : vector<16x32xf32>
    %4 = math.absf %2 : vector<16x32xf32>
    %5 = tpu.concatenate %0, %1, %2, %3, %4 in 1 : vector<16x32xf32>, vector<16x32xf32>, vector<16x32xf32>, vector<16x32xf32>, vector<16x32xf32> -> vector<16x160xf32>
    %c0_3 = arith.constant 0 : index
    %c0_4 = arith.constant 0 : index
    %6 = vector.load %arg3[%c0_3, %c0_4] : memref<160x128xbf16, #tpu.memory_space<vmem>>, vector<160x128xbf16>
    %c0_5 = arith.constant 0 : index
    %c0_6 = arith.constant 0 : index
    %7 = vector.load %arg4[%c0_5, %c0_6] : memref<1x128xf32, #tpu.memory_space<vmem>>, vector<1x128xf32>
    %8 = arith.truncf %5 : vector<16x160xf32> to vector<16x160xbf16>
    %cst = arith.constant dense<0.000000e+00> : vector<16x128xf32>
    %9 = tpu.matmul %8, %6, %cst {dimension_numbers = #tpu.dot_dimension_numbers<[1], [0], [0], [1], [0, 0, 1, 1], [], []>} : vector<16x160xbf16>, vector<160x128xbf16>, vector<16x128xf32> -> vector<16x128xf32>
    %10 = vector.broadcast %7 : vector<1x128xf32> to vector<16x128xf32>
    %11 = arith.addf %9, %10 : vector<16x128xf32>
    %cst_7 = arith.constant 0.000000e+00 : f32
    %12 = vector.broadcast %cst_7 : f32 to vector<16x128xf32>
    %13 = arith.maximumf %11, %12 : vector<16x128xf32>
    %c0_8 = arith.constant 0 : index
    %c0_9 = arith.constant 0 : index
    %14 = vector.load %arg5[%c0_8, %c0_9] : memref<128x128xbf16, #tpu.memory_space<vmem>>, vector<128x128xbf16>
    %c0_10 = arith.constant 0 : index
    %c0_11 = arith.constant 0 : index
    %15 = vector.load %arg6[%c0_10, %c0_11] : memref<1x128xf32, #tpu.memory_space<vmem>>, vector<1x128xf32>
    %16 = arith.truncf %13 : vector<16x128xf32> to vector<16x128xbf16>
    %cst_12 = arith.constant dense<0.000000e+00> : vector<16x128xf32>
    %17 = tpu.matmul %16, %14, %cst_12 {dimension_numbers = #tpu.dot_dimension_numbers<[1], [0], [0], [1], [0, 0, 1, 1], [], []>} : vector<16x128xbf16>, vector<128x128xbf16>, vector<16x128xf32> -> vector<16x128xf32>
    %18 = vector.broadcast %15 : vector<1x128xf32> to vector<16x128xf32>
    %19 = arith.addf %17, %18 : vector<16x128xf32>
    %cst_13 = arith.constant 0.000000e+00 : f32
    %20 = vector.broadcast %cst_13 : f32 to vector<16x128xf32>
    %21 = arith.maximumf %19, %20 : vector<16x128xf32>
    %c0_14 = arith.constant 0 : index
    %c0_15 = arith.constant 0 : index
    %22 = vector.load %arg7[%c0_14, %c0_15] : memref<128x16xbf16, #tpu.memory_space<vmem>>, vector<128x16xbf16>
    %c0_16 = arith.constant 0 : index
    %c0_17 = arith.constant 0 : index
    %23 = vector.load %arg8[%c0_16, %c0_17] : memref<1x16xf32, #tpu.memory_space<vmem>>, vector<1x16xf32>
    %24 = arith.truncf %21 : vector<16x128xf32> to vector<16x128xbf16>
    %cst_18 = arith.constant dense<0.000000e+00> : vector<16x16xf32>
    %25 = tpu.matmul %24, %22, %cst_18 {dimension_numbers = #tpu.dot_dimension_numbers<[1], [0], [0], [1], [0, 0, 1, 1], [], []>} : vector<16x128xbf16>, vector<128x16xbf16>, vector<16x16xf32> -> vector<16x16xf32>
    %26 = vector.broadcast %23 : vector<1x16xf32> to vector<16x16xf32>
    %27 = arith.addf %25, %26 : vector<16x16xf32>
    %28 = vector.extract_strided_slice %27 {offsets = [0, 0], sizes = [16, 8], strides = [1, 1]} : vector<16x16xf32> to vector<16x8xf32>
    %29 = vector.extract_strided_slice %27 {offsets = [0, 8], sizes = [16, 8], strides = [1, 1]} : vector<16x16xf32> to vector<16x8xf32>
    %30 = arith.addf %28, %29 : vector<16x8xf32>
    %cst_19 = arith.constant 5.000000e-01 : f32
    %31 = vector.broadcast %cst_19 : f32 to vector<16x8xf32>
    %32 = arith.mulf %30, %31 : vector<16x8xf32>
    %c0_20 = arith.constant 0 : index
    %c0_21 = arith.constant 0 : index
    %33 = vector.load %arg9[%c0_20, %c0_21] : memref<16x8xf32, #tpu.memory_space<vmem>>, vector<16x8xf32>
    tpu.vector_store %arg9[%c0_20, %c0_21], %32 {strides = array<i32>} : memref<16x8xf32, #tpu.memory_space<vmem>>, vector<16x8xf32>,
    return
  }
  func.func @transform_0(%arg0: i32) -> (i32, i32) {
    %c0_i32 = arith.constant 0 : i32
    %c0_i32_0 = arith.constant 0 : i32
    return %arg0, %c0_i32 : i32, i32
  }
  func.func @transform_1(%arg0: i32) -> (i32, i32) {
    %c0_i32 = arith.constant 0 : i32
    %c0_i32_0 = arith.constant 0 : i32
    return %arg0, %c0_i32 : i32, i32
  }
  func.func @transform_2(%arg0: i32) -> (i32, i32) {
    %c0_i32 = arith.constant 0 : i32
    %c0_i32_0 = arith.constant 0 : i32
    %c0_i32_1 = arith.constant 0 : i32
    return %c0_i32, %c0_i32_0 : i32, i32
  }
  func.func @transform_3(%arg0: i32) -> (i32, i32) {
    %c0_i32 = arith.constant 0 : i32
    %c0_i32_0 = arith.constant 0 : i32
    %c0_i32_1 = arith.constant 0 : i32
    return %c0_i32, %c0_i32_0 : i32, i32
  }
  func.func @transform_4(%arg0: i32) -> (i32, i32) {
    %c0_i32 = arith.constant 0 : i32
    %c0_i32_0 = arith.constant 0 : i32
    %c0_i32_1 = arith.constant 0 : i32
    return %c0_i32, %c0_i32_0 : i32, i32
  }
  func.func @transform_5(%arg0: i32) -> (i32, i32) {
    %c0_i32 = arith.constant 0 : i32
    %c0_i32_0 = arith.constant 0 : i32
    %c0_i32_1 = arith.constant 0 : i32
    return %c0_i32, %c0_i32_0 : i32, i32
  }
  func.func @transform_6(%arg0: i32) -> (i32, i32) {
    %c0_i32 = arith.constant 0 : i32
    %c0_i32_0 = arith.constant 0 : i32
    %c0_i32_1 = arith.constant 0 : i32
    return %c0_i32, %c0_i32_0 : i32, i32
  }
  func.func @transform_7(%arg0: i32) -> (i32, i32) {
    %c0_i32 = arith.constant 0 : i32
    %c0_i32_0 = arith.constant 0 : i32
    %c0_i32_1 = arith.constant 0 : i32
    return %c0_i32, %c0_i32_0 : i32, i32
  }
  func.func @transform_8(%arg0: i32) -> (i32, i32) {
    %c0_i32 = arith.constant 0 : i32
    %c0_i32_0 = arith.constant 0 : i32
    return %arg0, %c0_i32 : i32, i32
  }
}

</mosaic_0001>

<llo_original>
// kernel: tpu_custom_call.1
$region0: #{tpu_custom_call.1}
  #allocation0 [shape = 'u32[]', space=smem, size = 0x4, offset = 0x4, fixed_abs, tag = 'smem constant byte address 0x4 - core index']
  #allocation1 [shape = 'u32[72,128]{1,0:T(1,128)}', space=vmem, size = 0x9000, scoped, tag = 'internal scratch']
  %s0 = inlined_call_operand.vmem [shape: f32[64,32], index: 0, kind: input, shape index: {}]
  %s1 = inlined_call_operand.vmem [shape: f32[64,32], index: 1, kind: input, shape index: {}]
  %s2 = inlined_call_operand.vmem [shape: bf16[160,128], index: 2, kind: input, shape index: {}]
  %s3 = inlined_call_operand.vmem [shape: f32[1,128], index: 3, kind: input, shape index: {}]
  %s4 = inlined_call_operand.vmem [shape: bf16[128,128], index: 4, kind: input, shape index: {}]
  %s5 = inlined_call_operand.vmem [shape: f32[1,128], index: 5, kind: input, shape index: {}]
  %s6 = inlined_call_operand.vmem [shape: bf16[128,16], index: 6, kind: input, shape index: {}]
  %s7 = inlined_call_operand.vmem [shape: f32[1,16], index: 7, kind: input, shape index: {}]
  %s8 = inlined_call_operand.vmem [shape: f32[64,8], index: 8, kind: output, shape index: {}]
  %s9 = sld [smem:[#allocation0]]
  $region65: #{tpu_custom_call.1} parent=0
    _
  %s11 = ssub.s32 1, %s9
  %s12 = scalar_select 0, %s11, %s9
  loop: start=0, step=1, limit=6
  $region2: #{tpu_custom_call.1} parent=0 // loop_pre_header
    _
  $region3: #{tpu_custom_call.1} parent=0 // loop_header
    %s14 = sphi 0, %s18
    %p15 = scmp.ge.s32.totalorder %s14, 6
    %s24 = sphi 0, %s26
    %s27 = sphi 0, %s24
    %s28 = sphi 0, %s27
    %s44 = sphi 0, %s28
    %s50 = sphi 0, %s52
    %s53 = sphi 0, %s50
    %s54 = sphi 0, %s53
    %s70 = sphi 0, %s54
    %s74 = sphi 0, %s74
    %s76 = sphi 0, %s74
    %s77 = sphi 0, %s76
    %s91 = sphi 0, %s77
    %s95 = sphi 0, %s95
    %s97 = sphi 0, %s95
    %s98 = sphi 0, %s97
    %s112 = sphi 0, %s98
    %s116 = sphi 0, %s116
    %s118 = sphi 0, %s116
    %s119 = sphi 0, %s118
    %s133 = sphi 0, %s119
    %s137 = sphi 0, %s137
    %s139 = sphi 0, %s137
    %s140 = sphi 0, %s139
    %s154 = sphi 0, %s140
    %s158 = sphi 0, %s158
    %s160 = sphi 0, %s158
    %s161 = sphi 0, %s160
    %s175 = sphi 0, %s161
    %s179 = sphi 0, %s179
    %s181 = sphi 0, %s179
    %s182 = sphi 0, %s181
    %s196 = sphi 0, %s182
    %s202 = sphi 0, %s204
    %s205 = sphi 0, %s202
    %s206 = sphi 0, %s205
    %s222 = sphi 0, %s206
  $region4: #{tpu_custom_call.1} parent=0 // loop_header_branch
    %17 = sbr.rel (%p15) target = $region8
  $region5: #{tpu_custom_call.1} parent=0 // loop_body
    %s19 = ssub.s32 %s14, 1
    %s20 = ssub.s32 %s14, 2
    %s21 = sadd.s32 %s14, 1
    %s22 = ssub.s32 %s14, %s21
    %p23 = scmp.eq.s32.totalorder %s22, 0
    %s25 = sadd.s32 %s24, 1
    %s26 = scalar_select %p23, %s24, %s25
    %p29 = pneg %p23
    %p30 = scmp.eq.s32.totalorder %s14, 3
    %p31 = por %p29, %p30
    %p32 = scmp.ne.s32.totalorder %s24, %s27
    %p33 = scmp.eq.s32.totalorder %s14, 0
    %p34 = por %p32, %p33
    %p35 = scmp.ne.s32.totalorder %s24, %s27
    %p36 = scmp.eq.s32.totalorder %s19, 3
    %p37 = por %p35, %p36
    %p38 = scmp.ne.s32.totalorder %s27, %s28
    %p39 = scmp.eq.s32.totalorder %s19, 0
    %p40 = por %p38, %p39
    %p41 = scmp.ne.s32.totalorder %s27, %s28
    %p42 = scmp.eq.s32.totalorder %s20, 3
    %p43 = por %p41, %p42
    %p45 = scmp.ne.s32.totalorder %s28, %s44
    %p46 = scmp.eq.s32.totalorder %s20, 0
    %p47 = por %p45, %p46
    %s48 = ssub.s32 %s14, %s21
    %p49 = scmp.eq.s32.totalorder %s48, 0
    %s51 = sadd.s32 %s50, 1
    %s52 = scalar_select %p49, %s50, %s51
    %p55 = pneg %p49
    %p56 = scmp.eq.s32.totalorder %s14, 3
    %p57 = por %p55, %p56
    %p58 = scmp.ne.s32.totalorder %s50, %s53
    %p59 = scmp.eq.s32.totalorder %s14, 0
    %p60 = por %p58, %p59
    %p61 = scmp.ne.s32.totalorder %s50, %s53
    %p62 = scmp.eq.s32.totalorder %s19, 3
    %p63 = por %p61, %p62
    %p64 = scmp.ne.s32.totalorder %s53, %s54
    %p65 = scmp.eq.s32.totalorder %s19, 0
    %p66 = por %p64, %p65
    %p67 = scmp.ne.s32.totalorder %s53, %s54
    %p68 = scmp.eq.s32.totalorder %s20, 3
    %p69 = por %p67, %p68
    %p71 = scmp.ne.s32.totalorder %s54, %s70
    %p72 = scmp.eq.s32.totalorder %s20, 0
    %p73 = por %p71, %p72
    %s75 = sadd.s32 %s74, 1
    %p78 = scmp.eq.s32.totalorder %s14, 3
    %p79 = scmp.ne.s32.totalorder %s74, %s76
    %p80 = scmp.eq.s32.totalorder %s14, 0
    %p81 = por %p79, %p80
    %p82 = scmp.ne.s32.totalorder %s74, %s76
    %p83 = scmp.eq.s32.totalorder %s19, 3
    %p84 = por %p82, %p83
    %p85 = scmp.ne.s32.totalorder %s76, %s77
    %p86 = scmp.eq.s32.totalorder %s19, 0
    %p87 = por %p85, %p86
    %p88 = scmp.ne.s32.totalorder %s76, %s77
    %p89 = scmp.eq.s32.totalorder %s20, 3
    %p90 = por %p88, %p89
    %p92 = scmp.ne.s32.totalorder %s77, %s91
    %p93 = scmp.eq.s32.totalorder %s20, 0
    %p94 = por %p92, %p93
    %s96 = sadd.s32 %s95, 1
    %p99 = scmp.eq.s32.totalorder %s14, 3
    %p100 = scmp.ne.s32.totalorder %s95, %s97
    %p101 = scmp.eq.s32.totalorder %s14, 0
    %p102 = por %p100, %p101
    %p103 = scmp.ne.s32.totalorder %s95, %s97
    %p104 = scmp.eq.s32.totalorder %s19, 3
    %p105 = por %p103, %p104
    %p106 = scmp.ne.s32.totalorder %s97, %s98
    %p107 = scmp.eq.s32.totalorder %s19, 0
    %p108 = por %p106, %p107
    %p109 = scmp.ne.s32.totalorder %s97, %s98
    %p110 = scmp.eq.s32.totalorder %s20, 3
    %p111 = por %p109, %p110
    %p113 = scmp.ne.s32.totalorder %s98, %s112
    %p114 = scmp.eq.s32.totalorder %s20, 0
    %p115 = por %p113, %p114
    %s117 = sadd.s32 %s116, 1
    %p120 = scmp.eq.s32.totalorder %s14, 3
    %p121 = scmp.ne.s32.totalorder %s116, %s118
    %p122 = scmp.eq.s32.totalorder %s14, 0
    %p123 = por %p121, %p122
    %p124 = scmp.ne.s32.totalorder %s116, %s118
    %p125 = scmp.eq.s32.totalorder %s19, 3
    %p126 = por %p124, %p125
    %p127 = scmp.ne.s32.totalorder %s118, %s119
    %p128 = scmp.eq.s32.totalorder %s19, 0
    %p129 = por %p127, %p128
    %p130 = scmp.ne.s32.totalorder %s118, %s119
    %p131 = scmp.eq.s32.totalorder %s20, 3
    %p132 = por %p130, %p131
    %p134 = scmp.ne.s32.totalorder %s119, %s133
    %p135 = scmp.eq.s32.totalorder %s20, 0
    %p136 = por %p134, %p135
    %s138 = sadd.s32 %s137, 1
    %p141 = scmp.eq.s32.totalorder %s14, 3
    %p142 = scmp.ne.s32.totalorder %s137, %s139
    %p143 = scmp.eq.s32.totalorder %s14, 0
    %p144 = por %p142, %p143
    %p145 = scmp.ne.s32.totalorder %s137, %s139
    %p146 = scmp.eq.s32.totalorder %s19, 3
    %p147 = por %p145, %p146
    %p148 = scmp.ne.s32.totalorder %s139, %s140
    %p149 = scmp.eq.s32.totalorder %s19, 0
    %p150 = por %p148, %p149
    %p151 = scmp.ne.s32.totalorder %s139, %s140
    %p152 = scmp.eq.s32.totalorder %s20, 3
    %p153 = por %p151, %p152
    %p155 = scmp.ne.s32.totalorder %s140, %s154
    %p156 = scmp.eq.s32.totalorder %s20, 0
    %p157 = por %p155, %p156
    %s159 = sadd.s32 %s158, 1
    %p162 = scmp.eq.s32.totalorder %s14, 3
    %p163 = scmp.ne.s32.totalorder %s158, %s160
    %p164 = scmp.eq.s32.totalorder %s14, 0
    %p165 = por %p163, %p164
    %p166 = scmp.ne.s32.totalorder %s158, %s160
    %p167 = scmp.eq.s32.totalorder %s19, 3
    %p168 = por %p166, %p167
    %p169 = scmp.ne.s32.totalorder %s160, %s161
    %p170 = scmp.eq.s32.totalorder %s19, 0
    %p171 = por %p169, %p170
    %p172 = scmp.ne.s32.totalorder %s160, %s161
    %p173 = scmp.eq.s32.totalorder %s20, 3
    %p174 = por %p172, %p173
    %p176 = scmp.ne.s32.totalorder %s161, %s175
    %p177 = scmp.eq.s32.totalorder %s20, 0
    %p178 = por %p176, %p177
    %s180 = sadd.s32 %s179, 1
    %p183 = scmp.eq.s32.totalorder %s14, 3
    %p184 = scmp.ne.s32.totalorder %s179, %s181
    %p185 = scmp.eq.s32.totalorder %s14, 0
    %p186 = por %p184, %p185
    %p187 = scmp.ne.s32.totalorder %s179, %s181
    %p188 = scmp.eq.s32.totalorder %s19, 3
    %p189 = por %p187, %p188
    %p190 = scmp.ne.s32.totalorder %s181, %s182
    %p191 = scmp.eq.s32.totalorder %s19, 0
    %p192 = por %p190, %p191
    %p193 = scmp.ne.s32.totalorder %s181, %s182
    %p194 = scmp.eq.s32.totalorder %s20, 3
    %p195 = por %p193, %p194
    %p197 = scmp.ne.s32.totalorder %s182, %s196
    %p198 = scmp.eq.s32.totalorder %s20, 0
    %p199 = por %p197, %p198
    %s200 = ssub.s32 %s14, %s21
    %p201 = scmp.eq.s32.totalorder %s200, 0
    %s203 = sadd.s32 %s202, 1
    %s204 = scalar_select %p201, %s202, %s203
    %p207 = pneg %p201
    %p208 = scmp.eq.s32.totalorder %s14, 3
    %p209 = por %p207, %p208
    %p210 = scmp.ne.s32.totalorder %s202, %s205
    %p211 = scmp.eq.s32.totalorder %s14, 0
    %p212 = por %p210, %p211
    %p213 = scmp.ne.s32.totalorder %s202, %s205
    %p214 = scmp.eq.s32.totalorder %s19, 3
    %p215 = por %p213, %p214
    %p216 = scmp.ne.s32.totalorder %s205, %s206
    %p217 = scmp.eq.s32.totalorder %s19, 0
    %p218 = por %p216, %p217
    %p219 = scmp.ne.s32.totalorder %s205, %s206
    %p220 = scmp.eq.s32.totalorder %s20, 3
    %p221 = por %p219, %p220
    %p223 = scmp.ne.s32.totalorder %s206, %s222
    %p224 = scmp.eq.s32.totalorder %s20, 0
    %p225 = por %p223, %p224
    %p226 = scmp.le.s32.totalorder 1, %s14
    %p227 = scmp.lt.s32.totalorder %s14, 5
    %p228 = pnand %p226, %p227
    %p229 = pneg %p228
    // Predicated region
    $region9: #{tpu_custom_call.1} parent=5 // pred_check
      _
    $region10: #{tpu_custom_call.1} parent=5 // pred_check_branch
      %231 = sbr.rel (%p228) target = $region12
    $region11: #{tpu_custom_call.1} parent=5 // pred_region
      %s232 = ssub.s32 %s14, 1
      // Predicated region
      $region13: #{tpu_custom_call.1} parent=11 // pred_check
        %p233 = pneg %p87
      $region14: #{tpu_custom_call.1} parent=11 // pred_check_branch
        %235 = sbr.rel (%p233) target = $region16
      $region15: #{tpu_custom_call.1} parent=11 // pred_region
        _
      $region16: #{tpu_custom_call.1} parent=11 // pred_fallthru
        _
      // Predicated region
      $region17: #{tpu_custom_call.1} parent=11 // pred_check
        %p236 = pneg %p108
      $region18: #{tpu_custom_call.1} parent=11 // pred_check_branch
        %238 = sbr.rel (%p236) target = $region20
      $region19: #{tpu_custom_call.1} parent=11 // pred_region
        _
      $region20: #{tpu_custom_call.1} parent=11 // pred_fallthru
        _
      // Predicated region
      $region21: #{tpu_custom_call.1} parent=11 // pred_check
        %p239 = pneg %p129
      $region22: #{tpu_custom_call.1} parent=11 // pred_check_branch
        %241 = sbr.rel (%p239) target = $region24
      $region23: #{tpu_custom_call.1} parent=11 // pred_region
        _
      $region24: #{tpu_custom_call.1} parent=11 // pred_fallthru
        _
      // Predicated region
      $region25: #{tpu_custom_call.1} parent=11 // pred_check
        %p242 = pneg %p150
      $region26: #{tpu_custom_call.1} parent=11 // pred_check_branch
        %244 = sbr.rel (%p242) target = $region28
      $region27: #{tpu_custom_call.1} parent=11 // pred_region
        _
      $region28: #{tpu_custom_call.1} parent=11 // pred_fallthru
        _
      // Predicated region
      $region29: #{tpu_custom_call.1} parent=11 // pred_check
        %p245 = pneg %p171
      $region30: #{tpu_custom_call.1} parent=11 // pred_check_branch
        %247 = sbr.rel (%p245) target = $region32
      $region31: #{tpu_custom_call.1} parent=11 // pred_region
        _
      $region32: #{tpu_custom_call.1} parent=11 // pred_fallthru
        _
      // Predicated region
      $region33: #{tpu_custom_call.1} parent=11 // pred_check
        %p248 = pneg %p192
      $region34: #{tpu_custom_call.1} parent=11 // pred_check_branch
        %250 = sbr.rel (%p248) target = $region36
      $region35: #{tpu_custom_call.1} parent=11 // pred_region
        _
      $region36: #{tpu_custom_call.1} parent=11 // pred_fallthru
        _
    $region12: #{tpu_custom_call.1} parent=5 // pred_fallthru
      _
    %p251 = scmp.lt.s32.totalorder %s14, 4
    // Predicated region
    $region37: #{tpu_custom_call.1} parent=5 // pred_check
      %p252 = pneg %p251
    $region38: #{tpu_custom_call.1} parent=5 // pred_check_branch
      %254 = sbr.rel (%p252) target = $region40
    $region39: #{tpu_custom_call.1} parent=5 // pred_region
      // Predicated region
      $region41: #{tpu_custom_call.1} parent=39 // pred_check
        %p255 = pneg %p34
      $region42: #{tpu_custom_call.1} parent=39 // pred_check_branch
        %257 = sbr.rel (%p255) target = $region44
      $region43: #{tpu_custom_call.1} parent=39 // pred_region
        %s258 = smul.u32 2, %s14
        %p259 = scmp.lt.s32.totalorder %s258, 7
        %s260 = scalar_select %p259, %s258, 7
        %s261 = smul.addr %s260, 8
        %s262 = scalar_lea.vmem %s0, %s261
        %s263 = smul.u32 2, %s14
      $region44: #{tpu_custom_call.1} parent=39 // pred_fallthru
        _
      // Predicated region
      $region45: #{tpu_custom_call.1} parent=39 // pred_check
        %p264 = pneg %p60
      $region46: #{tpu_custom_call.1} parent=39 // pred_check_branch
        %266 = sbr.rel (%p264) target = $region48
      $region47: #{tpu_custom_call.1} parent=39 // pred_region
        %s267 = smul.u32 2, %s14
        %p268 = scmp.lt.s32.totalorder %s267, 7
        %s269 = scalar_select %p268, %s267, 7
        %s270 = smul.addr %s269, 8
        %s271 = scalar_lea.vmem %s1, %s270
        %s272 = smul.u32 2, %s14
      $region48: #{tpu_custom_call.1} parent=39 // pred_fallthru
        _
    $region40: #{tpu_custom_call.1} parent=5 // pred_fallthru
      _
    %p273 = scmp.le.s32.totalorder 1, %s14
    %p274 = scmp.lt.s32.totalorder %s14, 5
    %p275 = pnand %p273, %p274
    %p276 = pneg %p275
    // Predicated region
    $region49: #{tpu_custom_call.1} parent=5 // pred_check
      _
    $region50: #{tpu_custom_call.1} parent=5 // pred_check_branch
      %278 = sbr.rel (%p275) target = $region52
    $region51: #{tpu_custom_call.1} parent=5 // pred_region
      %s279 = ssub.s32 %s14, 1
      %s280 = smul.u32 2, %s19
      %p281 = scmp.lt.s32.totalorder %s280, 7
      %s282 = scalar_select %p281, %s280, 7
      %s283 = smul.addr %s282, 8
      %s284 = scalar_lea.vmem %s0, %s283
      %p285 = pneg %p40
      %p286 = pneg %p37
      %s287 = smul.u32 2, %s19
      %p288 = scmp.lt.s32.totalorder %s287, 7
      %s289 = scalar_select %p288, %s287, 7
      %s290 = smul.addr %s289, 8
      %s291 = scalar_lea.vmem %s1, %s290
      %p292 = pneg %p66
      %p293 = pneg %p63
      %p294 = pneg %p87
      %p295 = pneg %p84
      %p296 = pneg %p108
      %p297 = pneg %p105
      %p298 = pneg %p129
      %p299 = pneg %p126
      %p300 = pneg %p150
      %p301 = pneg %p147
      %p302 = pneg %p171
      %p303 = pneg %p168
      %p304 = pneg %p192
      %p305 = pneg %p189
      %p306 = pneg %p218
      %p307 = pneg %p215
      %s308 = smul.u32 2, %s19
      %p309 = scmp.lt.s32.totalorder %s308, 7
      %s310 = scalar_select %p309, %s308, 7
      %s311 = smul.addr %s310, 8
      %s312 = scalar_lea.vmem %s8, %s311
      %s313 = smul.u32 2, %s19
      %p314 = scmp.lt.s32.totalorder %s313, 7
      %s315 = scalar_select %p314, %s313, 7
      %s316 = smul.addr %s315, 8
      %s317 = scalar_lea.vmem %s0, %s316
      %s318 = smul.u32 2, %s19
      %s319 = smul.u32 2, %s19
      %p320 = scmp.lt.s32.totalorder %s319, 7
      %s321 = scalar_select %p320, %s319, 7
      %s322 = smul.addr %s321, 8
      %s323 = scalar_lea.vmem %s1, %s322
      %s324 = smul.u32 2, %s19
      %s325 = smul.u32 2, %s19
      %p326 = scmp.lt.s32.totalorder %s325, 7
      %s327 = scalar_select %p326, %s325, 7
      %s328 = smul.addr %s327, 8
      %s329 = scalar_lea.vmem %s8, %s328
      %s330 = smul.u32 2, %s19
      %v332 = vld [vmem:[%s317] sm:$0xff]
      %v333 = vld [vmem:[%s317 + $0x8] sm:$0xff]
      %v334 = vld [vmem:[%s323] sm:$0xff]
      %v335 = vld [vmem:[%s323 + $0x8] sm:$0xff]
      %v336 = vsub.f32 %v332, %v334
      %v337 = vsub.f32 %v333, %v335
      %v338 = vmul.f32 %v332, %v334
      %v339 = vmul.f32 %v333, %v335
      %v340 = vand.u32 2147483647, %v336
      %v341 = vand.u32 2147483647, %v337
      %344 = vrot.lane.b32.xlu0 %v334, 32
      %v345 = vpop.permute.xlu0 %344
      %346 = vrot.lane.b32.xlu0 %v335, 32
      %v347 = vpop.permute.xlu0 %346
      %352 = vrot.lane.b32.xlu0 %v336, 64
      %v353 = vpop.permute.xlu0 %352
      %354 = vrot.lane.b32.xlu0 %v337, 64
      %v355 = vpop.permute.xlu0 %354
      %360 = vrot.lane.b32.xlu0 %v338, 96
      %v361 = vpop.permute.xlu0 %360
      %362 = vrot.lane.b32.xlu0 %v339, 96
      %v363 = vpop.permute.xlu0 %362
      %vm366 = vcmask 261120
      %v367 = vsel %vm366, %v332, %v345
      %v368 = vsel %vm366, %v333, %v347
      %vm369 = vcmask 523264
      %v370 = vsel %vm369, %v367, %v353
      %v371 = vsel %vm369, %v368, %v355
      %vm372 = vcmask 785408
      %v373 = vsel %vm372, %v370, %v361
      %v374 = vsel %vm372, %v371, %v363
      %v375 = vld [vmem:[%s2] sm:$0xf]
      %v376 = vld [vmem:[%s2 + $0x4] sm:$0xf]
      %v377 = vld [vmem:[%s2 + $0x8] sm:$0xf]
      %v378 = vld [vmem:[%s2 + $0xc] sm:$0xf]
      %v379 = vld [vmem:[%s2 + $0x10] sm:$0xf]
      %v380 = vld [vmem:[%s2 + $0x14] sm:$0xf]
      %v381 = vld [vmem:[%s2 + $0x18] sm:$0xf]
      %v382 = vld [vmem:[%s2 + $0x1c] sm:$0xf]
      %v383 = vld [vmem:[%s2 + $0x20] sm:$0xf]
      %v384 = vld [vmem:[%s2 + $0x24] sm:$0xf]
      %v385 = vld [vmem:[%s2 + $0x28] sm:$0xf]
      %v386 = vld [vmem:[%s2 + $0x2c] sm:$0xf]
      %v387 = vld [vmem:[%s2 + $0x30] sm:$0xf]
      %v388 = vld [vmem:[%s2 + $0x34] sm:$0xf]
      %v389 = vld [vmem:[%s2 + $0x38] sm:$0xf]
      %v390 = vld [vmem:[%s2 + $0x3c] sm:$0xf]
      %v391 = vld [vmem:[%s2 + $0x40] sm:$0xf]
      %v392 = vld [vmem:[%s2 + $0x44] sm:$0xf]
      %v393 = vld [vmem:[%s2 + $0x48] sm:$0xf]
      %v394 = vld [vmem:[%s2 + $0x4c] sm:$0xf]
      %v395 = vld [vmem:[%s3] sm:$0x1]
      %v396 = vpack.c.bf16 %v374, %v373
      %v397 = vpack.c.bf16 %v341, %v340
      %v399 = vperm.slane %v395, 0
      %v421 = vunpack.c.l.b16 %v375
      %v422 = vunpack.c.l.b16 %v376
      %v423 = vunpack.c.l.b16 %v377
      %v424 = vunpack.c.l.b16 %v378
      %v425 = vunpack.c.l.b16 %v379
      %v426 = vunpack.c.l.b16 %v380
      %v427 = vunpack.c.l.b16 %v381
      %v428 = vunpack.c.l.b16 %v382
      %v429 = vunpack.c.l.b16 %v383
      %v430 = vunpack.c.l.b16 %v384
      %v431 = vunpack.c.l.b16 %v385
      %v432 = vunpack.c.l.b16 %v386
      %v433 = vunpack.c.l.b16 %v387
      %v434 = vunpack.c.l.b16 %v388
      %v435 = vunpack.c.l.b16 %v389
      %v436 = vunpack.c.l.b16 %v390
      %v437 = vunpack.c.l.b16 %v391
      %v438 = vunpack.c.l.b16 %v392
      %v439 = vunpack.c.l.b16 %v393
      %v440 = vunpack.c.l.b16 %v394
      %v441 = vpack.c.b16 %v422, %v421
      %v442 = vpack.c.b16 %v424, %v423
      %v443 = vpack.c.b16 %v426, %v425
      %v444 = vpack.c.b16 %v428, %v427
      %v445 = vpack.c.b16 %v430, %v429
      %v446 = vpack.c.b16 %v432, %v431
      %v447 = vpack.c.b16 %v434, %v433
      %v448 = vpack.c.b16 %v436, %v435
      %v449 = vpack.c.b16 %v438, %v437
      %v450 = vpack.c.b16 %v440, %v439
      %v462 = vsel %vm366, %v397, 0
      %464 = vmatpush.bf16.msra.mxu0 %v448
      %465 = vmatpush.bf16.msra.mxu0 %v447
      %466 = vmatpush.bf16.msra.mxu0 %v446
      %467 = vmatpush.bf16.msra.mxu0 %v445
      %468 = vmatpush.bf16.msra.mxu0 %v444
      %469 = vmatpush.bf16.msra.mxu0 %v443
      %470 = vmatpush.bf16.msra.mxu0 %v442
      %471 = vmatpush.bf16.msra.mxu0 %v441
      %472 = vmatmul.bf16.gmra.mxu0 %v396
      %v473 = vpop.f32.mrf.mxu0
      %v474 = vadd.f32 %v399, %v473
      %v475 = vpop.f32.mrf.mxu0
      %v476 = vadd.f32 %v399, %v475
      %477 = vdwg.mxu0
      %478 = vmatpush.bf16.msra.mxu0 0
      %479 = vmatpush.bf16.msra.mxu0 0
      %480 = vmatpush.bf16.msra.mxu0 0
      %481 = vmatpush.bf16.msra.mxu0 0
      %482 = vmatpush.bf16.msra.mxu0 0
      %483 = vmatpush.bf16.msra.mxu0 0
      %484 = vmatpush.bf16.msra.mxu0 %v450
      %485 = vmatpush.bf16.msra.mxu0 %v449
      %486 = vmatmul.bf16.gmra.mxu0 %v462
      %v487 = vpop.f32.mrf.mxu0
      %v488 = vadd.f32 %v474, %v487
      %v489 = vpop.f32.mrf.mxu0
      %v490 = vadd.f32 %v476, %v489
      %491 = vdwg.mxu0
      %v492 = vmax.f32 %v488, 0.0
      %v493 = vmax.f32 %v490, 0.0
      %v494 = vld [vmem:[%s4] sm:$0xf]
      %v495 = vld [vmem:[%s4 + $0x4] sm:$0xf]
      %v496 = vld [vmem:[%s4 + $0x8] sm:$0xf]
      %v497 = vld [vmem:[%s4 + $0xc] sm:$0xf]
      %v498 = vld [vmem:[%s4 + $0x10] sm:$0xf]
      %v499 = vld [vmem:[%s4 + $0x14] sm:$0xf]
      %v500 = vld [vmem:[%s4 + $0x18] sm:$0xf]
      %v501 = vld [vmem:[%s4 + $0x1c] sm:$0xf]
      %v502 = vld [vmem:[%s4 + $0x20] sm:$0xf]
      %v503 = vld [vmem:[%s4 + $0x24] sm:$0xf]
      %v504 = vld [vmem:[%s4 + $0x28] sm:$0xf]
      %v505 = vld [vmem:[%s4 + $0x2c] sm:$0xf]
      %v506 = vld [vmem:[%s4 + $0x30] sm:$0xf]
      %v507 = vld [vmem:[%s4 + $0x34] sm:$0xf]
      %v508 = vld [vmem:[%s4 + $0x38] sm:$0xf]
      %v509 = vld [vmem:[%s4 + $0x3c] sm:$0xf]
      %v510 = vld [vmem:[%s5] sm:$0x1]
      %v511 = vpack.c.bf16 %v493, %v492
      %v513 = vperm.slane %v510, 0
      %v531 = vunpack.c.l.b16 %v494
      %v532 = vunpack.c.l.b16 %v495
      %v533 = vunpack.c.l.b16 %v496
      %v534 = vunpack.c.l.b16 %v497
      %v535 = vunpack.c.l.b16 %v498
      %v536 = vunpack.c.l.b16 %v499
      %v537 = vunpack.c.l.b16 %v500
      %v538 = vunpack.c.l.b16 %v501
      %v539 = vunpack.c.l.b16 %v502
      %v540 = vunpack.c.l.b16 %v503
      %v541 = vunpack.c.l.b16 %v504
      %v542 = vunpack.c.l.b16 %v505
      %v543 = vunpack.c.l.b16 %v506
      %v544 = vunpack.c.l.b16 %v507
      %v545 = vunpack.c.l.b16 %v508
      %v546 = vunpack.c.l.b16 %v509
      %v547 = vpack.c.b16 %v532, %v531
      %v548 = vpack.c.b16 %v534, %v533
      %v549 = vpack.c.b16 %v536, %v535
      %v550 = vpack.c.b16 %v538, %v537
      %v551 = vpack.c.b16 %v540, %v539
      %v552 = vpack.c.b16 %v542, %v541
      %v553 = vpack.c.b16 %v544, %v543
      %v554 = vpack.c.b16 %v546, %v545
      %563 = vmatpush.bf16.msra.mxu0 %v554
      %564 = vmatpush.bf16.msra.mxu0 %v553
      %565 = vmatpush.bf16.msra.mxu0 %v552
      %566 = vmatpush.bf16.msra.mxu0 %v551
      %567 = vmatpush.bf16.msra.mxu0 %v550
      %568 = vmatpush.bf16.msra.mxu0 %v549
      %569 = vmatpush.bf16.msra.mxu0 %v548
      %570 = vmatpush.bf16.msra.mxu0 %v547
      %571 = vmatmul.bf16.gmra.mxu0 %v511
      %v572 = vpop.f32.mrf.mxu0
      %v573 = vadd.f32 %v513, %v572
      %v574 = vpop.f32.mrf.mxu0
      %v575 = vadd.f32 %v513, %v574
      %576 = vdwg.mxu0
      %v577 = vmax.f32 %v573, 0.0
      %v578 = vmax.f32 %v575, 0.0
      %v579 = vld [vmem:[%s6] sm:$0xf]
      %v580 = vld [vmem:[%s6 + $0x4] sm:$0xf]
      %v581 = vld [vmem:[%s6 + $0x8] sm:$0xf]
      %v582 = vld [vmem:[%s6 + $0xc] sm:$0xf]
      %v583 = vld [vmem:[%s6 + $0x10] sm:$0xf]
      %v584 = vld [vmem:[%s6 + $0x14] sm:$0xf]
      %v585 = vld [vmem:[%s6 + $0x18] sm:$0xf]
      %v586 = vld [vmem:[%s6 + $0x1c] sm:$0xf]
      %v587 = vld [vmem:[%s6 + $0x20] sm:$0xf]
      %v588 = vld [vmem:[%s6 + $0x24] sm:$0xf]
      %v589 = vld [vmem:[%s6 + $0x28] sm:$0xf]
      %v590 = vld [vmem:[%s6 + $0x2c] sm:$0xf]
      %v591 = vld [vmem:[%s6 + $0x30] sm:$0xf]
      %v592 = vld [vmem:[%s6 + $0x34] sm:$0xf]
      %v593 = vld [vmem:[%s6 + $0x38] sm:$0xf]
      %v594 = vld [vmem:[%s6 + $0x3c] sm:$0xf]
      %v595 = vld [vmem:[%s7] sm:$0x1]
      %v596 = vpack.c.bf16 %v578, %v577
      %v598 = vperm.slane %v595, 0
      %v616 = vunpack.c.l.b16 %v579
      %v617 = vunpack.c.l.b16 %v580
      %v618 = vunpack.c.l.b16 %v581
      %v619 = vunpack.c.l.b16 %v582
      %v620 = vunpack.c.l.b16 %v583
      %v621 = vunpack.c.l.b16 %v584
      %v622 = vunpack.c.l.b16 %v585
      %v623 = vunpack.c.l.b16 %v586
      %v624 = vunpack.c.l.b16 %v587
      %v625 = vunpack.c.l.b16 %v588
      %v626 = vunpack.c.l.b16 %v589
      %v627 = vunpack.c.l.b16 %v590
      %v628 = vunpack.c.l.b16 %v591
      %v629 = vunpack.c.l.b16 %v592
      %v630 = vunpack.c.l.b16 %v593
      %v631 = vunpack.c.l.b16 %v594
      %v632 = vpack.c.b16 %v617, %v616
      %v633 = vpack.c.b16 %v619, %v618
      %v634 = vpack.c.b16 %v621, %v620
      %v635 = vpack.c.b16 %v623, %v622
      %v636 = vpack.c.b16 %v625, %v624
      %v637 = vpack.c.b16 %v627, %v626
      %v638 = vpack.c.b16 %v629, %v628
      %v639 = vpack.c.b16 %v631, %v630
      %648 = vmatpush.bf16.msra.mxu0 %v639
      %649 = vmatpush.bf16.msra.mxu0 %v638
      %650 = vmatpush.bf16.msra.mxu0 %v637
      %651 = vmatpush.bf16.msra.mxu0 %v636
      %652 = vmatpush.bf16.msra.mxu0 %v635
      %653 = vmatpush.bf16.msra.mxu0 %v634
      %654 = vmatpush.bf16.msra.mxu0 %v633
      %655 = vmatpush.bf16.msra.mxu0 %v632
      %656 = vmatmul.bf16.gmra.mxu0 %v596
      %v657 = vpop.f32.mrf.mxu0
      %v658 = vadd.f32 %v598, %v657
      %v659 = vpop.f32.mrf.mxu0
      %v660 = vadd.f32 %v598, %v659
      %661 = vdwg.mxu0
      %664 = vrot.lane.b32.xlu0 %v658, 120
      %v665 = vpop.permute.xlu0 %664
      %666 = vrot.lane.b32.xlu0 %v660, 120
      %v667 = vpop.permute.xlu0 %666
      %v670 = vadd.f32 %v658, %v665
      %v671 = vadd.f32 %v660, %v667
      %v672 = vmul.f32 %v670, 0.5
      %v673 = vmul.f32 %v671, 0.5
      %vm674 = vcmask 64512
      %675 = vst.msk [vmem:[%s329] sm:$0xff] %vm674, %v672
      %676 = vst.msk [vmem:[%s329 + $0x8] sm:$0xff] %vm674, %v673
      %s677 = smul.u32 2, %s19
      %p678 = scmp.lt.s32.totalorder %s677, 7
      %s679 = scalar_select %p678, %s677, 7
      %s680 = smul.addr %s679, 8
      %s681 = scalar_lea.vmem %s8, %s680
      // Predicated region
      $region53: #{tpu_custom_call.1} parent=51 // pred_check
        %p682 = pneg %p215
      $region54: #{tpu_custom_call.1} parent=51 // pred_check_branch
        %684 = sbr.rel (%p682) target = $region56
      $region55: #{tpu_custom_call.1} parent=51 // pred_region
        %s685 = smul.u32 2, %s19
      $region56: #{tpu_custom_call.1} parent=51 // pred_fallthru
        _
    $region52: #{tpu_custom_call.1} parent=5 // pred_fallthru
      _
    %p686 = scmp.le.s32.totalorder 2, %s14
    // Predicated region
    $region57: #{tpu_custom_call.1} parent=5 // pred_check
      %p687 = pneg %p686
    $region58: #{tpu_custom_call.1} parent=5 // pred_check_branch
      %689 = sbr.rel (%p687) target = $region60
    $region59: #{tpu_custom_call.1} parent=5 // pred_region
      %s690 = ssub.s32 %s14, 2
      // Predicated region
      $region61: #{tpu_custom_call.1} parent=59 // pred_check
        %p691 = pneg %p221
      $region62: #{tpu_custom_call.1} parent=59 // pred_check_branch
        %693 = sbr.rel (%p691) target = $region64
      $region63: #{tpu_custom_call.1} parent=59 // pred_region
        %s694 = smul.u32 2, %s20
        %p695 = scmp.lt.s32.totalorder %s694, 7
        %s696 = scalar_select %p695, %s694, 7
        %s697 = smul.addr %s696, 8
        %s698 = scalar_lea.vmem %s8, %s697
      $region64: #{tpu_custom_call.1} parent=59 // pred_fallthru
        _
    $region60: #{tpu_custom_call.1} parent=5 // pred_fallthru
      _
  $region6: #{tpu_custom_call.1} parent=0 // loop_footer
    %s18 = sadd.s32 1, %s14
  $region7: #{tpu_custom_call.1} parent=0 // loop_footer_branch
    %13 = sbr.rel target = $region3
  $region8: #{tpu_custom_call.1} parent=0 // loop_exit
    _

</llo_original>
